<compile_context>
chip_gen: v7x
topology: tpu7x:2x2x1
jax: 0.10.0
libtpu: 0.0.40
codegen_flags: <defaults>
</compile_context>

<pallas_src>
import functools

import jax
import jax.numpy as jnp
from jax import lax
from jax.experimental import pallas as pl
from jax.experimental.pallas import tpu as pltpu


def _round_up(x, m):
    return ((x + m - 1) // m) * m


# ---------------------------------------------------------------------------
# Path A: key/embedding resident per batch element, query rows tiled.
# Query rows are sliced out of the resident key block (no separate hq stream).
# ---------------------------------------------------------------------------
def _memory_kernel_resident(hk_ref, emb_ref, mask_ref, o_ref, *, inv_hidden, tq):
    # hk_ref   : (1, S,  H)  hidden_state, transfer dtype (bf16 or f32)
    # emb_ref  : (1, S,  H)  embedding_c,  transfer dtype
    # mask_ref : (1, TQ, S)  party mask rows, transfer dtype
    # o_ref    : (1, TQ, H)  output, original dtype
    row0 = pl.multiple_of(pl.program_id(1) * tq, tq)
    hq = hk_ref[0, pl.ds(row0, tq), :]                     # (TQ, H) query rows
    hk = hk_ref[0]                                         # (S, H)

    # u[i, j] = sum_h hq[i, h] * hk[j, h]   (MXU, f32 accumulate, no transpose)
    u = lax.dot_general(hq, hk, (((1,), (1,)), ((), ())),
                        preferred_element_type=jnp.float32)
    u = u * inv_hidden                                     # scale f32 accumulator

    # Elementwise math stays f32 (v5e has no bf16 VPU/EUP).
    m = jnp.clip(mask_ref[0].astype(jnp.float32), 0.0, 1.0)
    d = jnp.exp(u) * m                                     # EUP + VPU
    s = jnp.sum(d, axis=-1, keepdims=True)                 # (TQ, 1)
    p = d * pl.reciprocal(s + 1e-10, approx=True)          # EUP approx reciprocal

    e = emb_ref[0]                                         # (S, H) transfer dtype
    o = jnp.dot(p.astype(e.dtype), e, preferred_element_type=jnp.float32)
    o_ref[0] = o.astype(o_ref.dtype)


# ---------------------------------------------------------------------------
# Path B: key-chunked fallback (per-step VMEM independent of S).  Innermost
# "arbitrary" grid axis runs over key tiles; running (unnormalized) sum and
# output accumulators live in VMEM scratch and are normalized on the last tile.
# ---------------------------------------------------------------------------
def _memory_kernel_chunked(hq_ref, hk_ref, emb_ref, mask_ref, o_ref,
                           sum_acc, o_acc, *, inv_hidden):
    # hq_ref   : (1, TQ, H)   query rows (resident across key tiles)
    # hk_ref   : (1, TK, H)   key chunk
    # emb_ref  : (1, TK, H)   embedding chunk
    # mask_ref : (1, TQ, TK)  mask tile
    # o_ref    : (1, TQ, H)   output
    # sum_acc  : (TQ, 1) f32  running row sum; o_acc : (TQ, H) f32 running o
    k = pl.program_id(2)

    @pl.when(k == 0)
    def _():
        sum_acc[...] = jnp.zeros_like(sum_acc)
        o_acc[...] = jnp.zeros_like(o_acc)

    u = lax.dot_general(hq_ref[0], hk_ref[0], (((1,), (1,)), ((), ())),
                        preferred_element_type=jnp.float32)
    u = u * inv_hidden
    m = jnp.clip(mask_ref[0].astype(jnp.float32), 0.0, 1.0)
    d = jnp.exp(u) * m                                     # (TQ, TK) f32

    sum_acc[...] += jnp.sum(d, axis=-1, keepdims=True)
    e = emb_ref[0]
    o_acc[...] += jnp.dot(d.astype(e.dtype), e, preferred_element_type=jnp.float32)

    @pl.when(k == pl.num_programs(2) - 1)
    def _():
        o_ref[0] = (o_acc[...] *
                    pl.reciprocal(sum_acc[...] + 1e-10, approx=True)
                    ).astype(o_ref.dtype)


# ---------------------------------------------------------------------------
# Tiling / VMEM-budget helpers
# ---------------------------------------------------------------------------
def _pick_row_tile(S, max_tq):
    """Largest query-row tile <= max_tq dividing S; prefers 256-, then 128-,
    then 8-aligned tiles (full MXU passes on v6e/v7x 2x256^2 and v5e 4x128^2)."""
    if S <= max_tq:
        return S
    for align in (256, 128, 8):
        tq = (max_tq // align) * align
        while tq >= align:
            if S % tq == 0:
                return tq
            tq -= align
    return S


def _pick_key_tile(S, max_tk):
    """Largest key tile <= max_tk that is a multiple of 128 (lane-full mask
    blocks) and divides S (S is padded to a multiple of 128 on this path)."""
    tk = min(max_tk, S)
    tk -= tk % 128
    while tk >= 128:
        if S % tk == 0:
            return tk
        tk -= 128
    return S


def _resident_vmem_bytes(S, H, TQ, t_item, o_item):
    # key + emb per-batch blocks (2 buffers each, conservative), streamed
    # mask/out (double-buffered) and f32 elementwise temporaries.
    resident = 2 * 2 * S * H * t_item
    streamed = 2 * TQ * S * t_item + 2 * TQ * H * o_item
    temps = 4 * (3 * TQ * S + 2 * TQ * H)
    return resident + streamed + temps


def _chunked_vmem_bytes(H, TQ, TK, t_item, o_item):
    streamed = 2 * t_item * (TQ * H + 2 * TK * H + TQ * TK) + 2 * o_item * TQ * H
    scratch = 4 * (TQ * H + TQ)
    temps = 4 * (3 * TQ * TK + TQ * H)
    return streamed + scratch + temps


# ---------------------------------------------------------------------------
# Wrapper
# ---------------------------------------------------------------------------
def memory_forward(embedding_c, hidden_state, party_mask_metrix, hidden_size, *,
                   mxu_dtype=jnp.bfloat16, max_row_tile=None, max_key_tile=512,
                   force_key_chunk=False):
    B, S, H = hidden_state.shape
    assert embedding_c.shape == (B, S, H)
    assert party_mask_metrix.shape == (B, S, S)

    out_dtype = embedding_c.dtype
    o_item = jnp.dtype(out_dtype).itemsize
    transfer_dtype = jnp.dtype(mxu_dtype)
    t_item = transfer_dtype.itemsize

    # Per-TensorCore VMEM budget with headroom for Mosaic internal scratch.
    try:
        phys_vmem = int(pltpu.get_tpu_info().vmem_capacity_bytes)
    except Exception:
        phys_vmem = 64 << 20                         # conservative (v7x per-TC)
    budget = phys_vmem - (16 << 20)

    if max_row_tile is None:
        # Bigger query tiles on 128-MiB-VMEM parts (v5e/v6e); 256 on v7x.
        max_row_tile = 512 if phys_vmem >= (100 << 20) else 256

    # Pad S to a friendly multiple instead of falling back to TQ=S.  Padded key
    # columns carry mask=0 (clamp(0)=0) so they contribute nothing; padded
    # query rows are sliced off below.
    S_pad = _round_up(S, 8)
    TQ = _pick_row_tile(S_pad, max_row_tile)
    use_chunked = (force_key_chunk or
                   _resident_vmem_bytes(S_pad, H, TQ, t_item, o_item) > budget)

    TK = None
    if use_chunked:
        S_pad = _round_up(S, 128)                    # key tiles are 128-aligned
        TQ = _pick_row_tile(S_pad, max_row_tile)
        TK = _pick_key_tile(S_pad, max_key_tile)
        while _chunked_vmem_bytes(H, TQ, TK, t_item, o_item) > budget:
            if TK > 128:
                TK = _pick_key_tile(S_pad, TK // 2)
            elif TQ > 8:
                TQ = _pick_row_tile(S_pad, max(TQ // 2, 8))
            else:
                break

    # Pad + cast ONCE in the wrapper (bf16 halves HBM->VMEM traffic, including
    # the dominant B*S*S mask stream); no per-step casts inside the kernel.
    def prep(x, pad_axes):
        if S_pad != S:
            pads = [(0, 0)] * x.ndim
            for ax in pad_axes:
                pads[ax] = (0, S_pad - S)
            x = jnp.pad(x, pads)
        return x.astype(transfer_dtype)

    hidden_p = prep(hidden_state, (1,))
    emb_p = prep(embedding_c, (1,))
    mask_p = prep(party_mask_metrix, (1, 2))

    inv_hidden = 1.0 / float(hidden_size)
    n_qt = S_pad // TQ

    cost = pl.CostEstimate(
        flops=4 * B * S_pad * S_pad * H,                      # two S*S*H matmuls / batch
        transcendentals=B * S_pad * S_pad + B * S_pad,        # exp + approx reciprocal
        bytes_accessed=t_item * (2 * B * S_pad * H + B * S_pad * S_pad)
        + o_item * B * S_pad * H)

    if not use_chunked:
        needed = _resident_vmem_bytes(S_pad, H, TQ, t_item, o_item)
        vmem_limit = int(min(max(needed + (8 << 20), 32 << 20), phys_vmem))
        out_pad = pl.pallas_call(
            functools.partial(_memory_kernel_resident,
                              inv_hidden=inv_hidden, tq=TQ),
            out_shape=jax.ShapeDtypeStruct((B, S_pad, H), out_dtype),
            grid_spec=pltpu.PrefetchScalarGridSpec(
                num_scalar_prefetch=0,
                grid=(B, n_qt),        # B*n_qt parallel points (feeds both v7x TCs)
                in_specs=[
                    # hidden (key side) — per-batch resident (index constant in q)
                    pl.BlockSpec((1, S_pad, H), lambda b, q: (b, 0, 0)),
                    # embedding_c — per-batch resident
                    pl.BlockSpec((1, S_pad, H), lambda b, q: (b, 0, 0)),
                    # party mask rows — streamed per q tile
                    pl.BlockSpec((1, TQ, S_pad), lambda b, q: (b, q, 0)),
                ],
                out_specs=pl.BlockSpec((1, TQ, H), lambda b, q: (b, q, 0)),
            ),
            compiler_params=pltpu.CompilerParams(
                dimension_semantics=("parallel", "parallel"),
                vmem_limit_bytes=vmem_limit),
            cost_estimate=cost,
        )(hidden_p, emb_p, mask_p)
    else:
        n_kt = S_pad // TK
        needed = _chunked_vmem_bytes(H, TQ, TK, t_item, o_item)
        vmem_limit = int(min(max(needed + (8 << 20), 32 << 20), phys_vmem))
        out_pad = pl.pallas_call(
            functools.partial(_memory_kernel_chunked, inv_hidden=inv_hidden),
            out_shape=jax.ShapeDtypeStruct((B, S_pad, H), out_dtype),
            grid_spec=pltpu.PrefetchScalarGridSpec(
                num_scalar_prefetch=0,
                grid=(B, n_qt, n_kt),
                in_specs=[
                    pl.BlockSpec((1, TQ, H), lambda b, q, k: (b, q, 0)),   # query rows
                    pl.BlockSpec((1, TK, H), lambda b, q, k: (b, k, 0)),   # key chunk
                    pl.BlockSpec((1, TK, H), lambda b, q, k: (b, k, 0)),   # embedding chunk
                    pl.BlockSpec((1, TQ, TK), lambda b, q, k: (b, q, k)),  # mask tile
                ],
                out_specs=pl.BlockSpec((1, TQ, H), lambda b, q, k: (b, q, 0)),
                scratch_shapes=[pltpu.VMEM((TQ, 1), jnp.float32),
                                pltpu.VMEM((TQ, H), jnp.float32)],
            ),
            compiler_params=pltpu.CompilerParams(
                dimension_semantics=("parallel", "parallel", "arbitrary"),
                vmem_limit_bytes=vmem_limit),
            cost_estimate=cost,
        )(hidden_p, hidden_p, emb_p, mask_p)

    if S_pad != S:
        out_pad = out_pad[:, :S, :]
    return out_pad


def memory_forward_ref(embedding_c, hidden_state, party_mask_metrix, hidden_size):
    """Pure-JAX reference mirroring the PyTorch forward exactly."""
    u = jnp.einsum("bsh,bth->bst", hidden_state, hidden_state) / hidden_size
    mask = jnp.clip(party_mask_metrix, 0.0, 1.0)
    exp_u = jnp.exp(u)
    delta = exp_u * mask
    s = jnp.sum(delta, axis=2, keepdims=True)
    p = delta / (s + 1e-10)
    return jnp.einsum("bst,bth->bsh", p, embedding_c)


if __name__ == "__main__":
    key = jax.random.PRNGKey(0)
    k1, k2, k3, k4 = jax.random.split(key, 4)

    # ---- Test 1: toy module shapes (resident path) ----------------------
    B, S, H = 2, 8, 32
    hidden_size = H
    embedding_c = jax.random.normal(k1, (B, S, H), dtype=jnp.float32)
    hidden_state = jax.random.normal(k2, (B, S, H), dtype=jnp.float32)
    # mask values outside [0, 1] to exercise the clamp
    party_mask = jax.random.randint(k3, (B, S, S), 0, 3).astype(jnp.float32)

    ref = memory_forward_ref(embedding_c, hidden_state, party_mask, hidden_size)

    out_f32 = jax.block_until_ready(memory_forward(
        embedding_c, hidden_state, party_mask, hidden_size,
        mxu_dtype=jnp.float32))
    assert out_f32.shape == (B, S, H)
    assert jnp.allclose(out_f32, ref, atol=2e-2, rtol=2e-2), \
        "f32 resident path mismatch vs reference"

    out_bf16 = jax.block_until_ready(memory_forward(
        embedding_c, hidden_state, party_mask, hidden_size,
        mxu_dtype=jnp.bfloat16))
    assert out_bf16.shape == (B, S, H)
    assert jnp.allclose(out_bf16, ref, atol=1e-1, rtol=1e-1), \
        "bf16 resident path mismatch vs reference"

    # ---- Test 2: key-chunked fallback path (also exercises S padding) ----
    B2, S2, H2 = 2, 250, 128          # S padded 250 -> 256, TK=128, TQ=128
    kk1, kk2, kk3 = jax.random.split(k4, 3)
    emb2 = jax.random.normal(kk1, (B2, S2, H2), dtype=jnp.float32)
    hid2 = jax.random.normal(kk2, (B2, S2, H2), dtype=jnp.float32)
    mask2 = jax.random.randint(kk3, (B2, S2, S2), 0, 2).astype(jnp.float32)
    ref2 = memory_forward_ref(emb2, hid2, mask2, H2)

    out2_f32 = jax.block_until_ready(memory_forward(
        emb2, hid2, mask2, H2, mxu_dtype=jnp.float32,
        force_key_chunk=True, max_key_tile=128, max_row_tile=128))
    assert out2_f32.shape == (B2, S2, H2)
    assert jnp.allclose(out2_f32, ref2, atol=2e-2, rtol=2e-2), \
        "f32 chunked path mismatch vs reference"

    out2_bf16 = jax.block_until_ready(memory_forward(
        emb2, hid2, mask2, H2, mxu_dtype=jnp.bfloat16,
        force_key_chunk=True, max_key_tile=128, max_row_tile=128))
    assert out2_bf16.shape == (B2, S2, H2)
    assert jnp.allclose(out2_bf16, ref2, atol=1e-1, rtol=1e-1), \
        "bf16 chunked path mismatch vs reference"

    print("KERNEL_OK")
</pallas_src>

<mosaic_0001>
module attributes {stable_mosaic.version = 11 : i64} {
  func.func @_memory_kernel_resident(%arg0: i32, %arg1: i32, %arg2: memref<1x8x32xf32, #tpu.memory_space<vmem>>, %arg3: memref<1x8x32xf32, #tpu.memory_space<vmem>>, %arg4: memref<1x8x8xf32, #tpu.memory_space<vmem>>, %arg5: memref<1x8x32xf32, #tpu.memory_space<vmem>>) attributes {dimension_semantics = [#tpu.dimension_semantics<parallel>, #tpu.dimension_semantics<parallel>], iteration_bounds = array<i64: 2, 1>, scalar_prefetch = 0 : i64, scratch_operands = 0 : i64, tpu.core_type = #tpu.core_type<tc>, window_params = [{transform_indices = @transform_0, window_bounds = array<i64: 1, 8, 32>}, {transform_indices = @transform_1, window_bounds = array<i64: 1, 8, 32>}, {transform_indices = @transform_2, window_bounds = array<i64: 1, 8, 8>}, {transform_indices = @transform_3, window_bounds = array<i64: 1, 8, 32>}]} {
    %c8_i32 = arith.constant 8 : i32
    %0 = arith.muli %arg1, %c8_i32 : i32
    %1 = tpu.assume_multiple %0, 8 : i32
    %c0 = arith.constant 0 : index
    %2 = arith.index_cast %1 : i32 to index
    %c0_0 = arith.constant 0 : index
    %3 = vector.load %arg2[%c0, %2, %c0_0] : memref<1x8x32xf32, #tpu.memory_space<vmem>>, vector<1x8x32xf32>
    %4 = vector.shape_cast %3 : vector<1x8x32xf32> to vector<8x32xf32>
    %c0_1 = arith.constant 0 : index
    %c0_2 = arith.constant 0 : index
    %c0_3 = arith.constant 0 : index
    %5 = vector.load %arg2[%c0_1, %c0_2, %c0_3] : memref<1x8x32xf32, #tpu.memory_space<vmem>>, vector<1x8x32xf32>
    %6 = vector.shape_cast %5 : vector<1x8x32xf32> to vector<8x32xf32>
    %cst = arith.constant dense<0.000000e+00> : vector<8x8xf32>
    %7 = tpu.matmul %4, %6, %cst {dimension_numbers = #tpu.dot_dimension_numbers<[1], [1], [0], [0], [0, 0, 1, 0], [], []>} : vector<8x32xf32>, vector<8x32xf32>, vector<8x8xf32> -> vector<8x8xf32>
    %cst_4 = arith.constant 3.125000e-02 : f32
    %8 = vector.broadcast %cst_4 : f32 to vector<8x8xf32>
    %9 = arith.mulf %7, %8 : vector<8x8xf32>
    %c0_5 = arith.constant 0 : index
    %c0_6 = arith.constant 0 : index
    %c0_7 = arith.constant 0 : index
    %10 = vector.load %arg4[%c0_5, %c0_6, %c0_7] : memref<1x8x8xf32, #tpu.memory_space<vmem>>, vector<1x8x8xf32>
    %11 = vector.shape_cast %10 : vector<1x8x8xf32> to vector<8x8xf32>
    %cst_8 = arith.constant 0.000000e+00 : f32
    %cst_9 = arith.constant 1.000000e+00 : f32
    %12 = vector.broadcast %cst_8 : f32 to vector<8x8xf32>
    %13 = arith.maximumf %12, %11 : vector<8x8xf32>
    %14 = vector.broadcast %cst_9 : f32 to vector<8x8xf32>
    %15 = arith.minimumf %14, %13 : vector<8x8xf32>
    %16 = math.exp %9 : vector<8x8xf32>
    %17 = arith.mulf %16, %15 : vector<8x8xf32>
    %cst_10 = arith.constant dense<0.000000e+00> : vector<8xf32>
    %18 = vector.multi_reduction <add>, %17, %cst_10 [1] : vector<8x8xf32> to vector<8xf32>
    %19 = vector.shape_cast %18 : vector<8xf32> to vector<8x1xf32>
    %cst_11 = arith.constant 1.000000e-10 : f32
    %20 = vector.broadcast %cst_11 : f32 to vector<8x1xf32>
    %21 = arith.addf %19, %20 : vector<8x1xf32>
    %22 = tpu.reciprocal %21 {approx = true} : vector<8x1xf32> -> vector<8x1xf32>
    %23 = vector.broadcast %22 : vector<8x1xf32> to vector<8x8xf32>
    %24 = arith.mulf %17, %23 : vector<8x8xf32>
    %c0_12 = arith.constant 0 : index
    %c0_13 = arith.constant 0 : index
    %c0_14 = arith.constant 0 : index
    %25 = vector.load %arg3[%c0_12, %c0_13, %c0_14] : memref<1x8x32xf32, #tpu.memory_space<vmem>>, vector<1x8x32xf32>
    %26 = vector.shape_cast %25 : vector<1x8x32xf32> to vector<8x32xf32>
    %cst_15 = arith.constant dense<0.000000e+00> : vector<8x32xf32>
    %27 = tpu.matmul %24, %26, %cst_15 {dimension_numbers = #tpu.dot_dimension_numbers<[1], [0], [0], [1], [0, 0, 1, 1], [], []>} : vector<8x8xf32>, vector<8x32xf32>, vector<8x32xf32> -> vector<8x32xf32>
    %c0_16 = arith.constant 0 : index
    %c0_17 = arith.constant 0 : index
    %c0_18 = arith.constant 0 : index
    %28 = vector.load %arg5[%c0_16, %c0_17, %c0_18] : memref<1x8x32xf32, #tpu.memory_space<vmem>>, vector<1x8x32xf32>
    %29 = vector.shape_cast %28 : vector<1x8x32xf32> to vector<8x32xf32>
    %30 = vector.shape_cast %27 : vector<8x32xf32> to vector<1x8x32xf32>
    tpu.vector_store %arg5[%c0_16, %c0_17, %c0_18], %30 {strides = array<i32>} : memref<1x8x32xf32, #tpu.memory_space<vmem>>, vector<1x8x32xf32>,
    return
  }
  func.func @transform_0(%arg0: i32, %arg1: i32) -> (i32, i32, i32) {
    %c0_i32 = arith.constant 0 : i32
    %c0_i32_0 = arith.constant 0 : i32
    %c0_i32_1 = arith.constant 0 : i32
    return %arg0, %c0_i32, %c0_i32_0 : i32, i32, i32
  }
  func.func @transform_1(%arg0: i32, %arg1: i32) -> (i32, i32, i32) {
    %c0_i32 = arith.constant 0 : i32
    %c0_i32_0 = arith.constant 0 : i32
    %c0_i32_1 = arith.constant 0 : i32
    return %arg0, %c0_i32, %c0_i32_0 : i32, i32, i32
  }
  func.func @transform_2(%arg0: i32, %arg1: i32) -> (i32, i32, i32) {
    %c0_i32 = arith.constant 0 : i32
    %c0_i32_0 = arith.constant 0 : i32
    return %arg0, %arg1, %c0_i32 : i32, i32, i32
  }
  func.func @transform_3(%arg0: i32, %arg1: i32) -> (i32, i32, i32) {
    %c0_i32 = arith.constant 0 : i32
    %c0_i32_0 = arith.constant 0 : i32
    return %arg0, %arg1, %c0_i32 : i32, i32, i32
  }
}

</mosaic_0001>

<llo_original>
// kernel: tpu_custom_call.1
$region0: #{tpu_custom_call.1}
  #allocation0 [shape = 'u32[]', space=smem, size = 0x4, offset = 0x4, fixed_abs, tag = 'smem constant byte address 0x4 - core index']
  #allocation1 [shape = 'u32[144,128]{1,0:T(1,128)}', space=vmem, size = 0x12000, scoped, tag = 'internal scratch']
  %s0 = inlined_call_operand.hbm [shape: f32[2,8,32], index: 0, kind: input, shape index: {}]
  %s1 = inlined_call_operand.hbm [shape: f32[2,8,32], index: 1, kind: input, shape index: {}]
  %s2 = inlined_call_operand.hbm [shape: f32[2,8,8], index: 2, kind: input, shape index: {}]
  %s3 = inlined_call_operand.hbm [shape: f32[2,8,32], index: 3, kind: output, shape index: {}]
  %s4 = sld [smem:[#allocation0]]
  $region57: #{tpu_custom_call.1} parent=0
    _
  %s6 = ssub.s32 1, %s4
  %s7 = scalar_select 0, %s6, %s4
  $region1: #{tpu_custom_call.1} parent=0
    #allocation2 [shape = 'u8[8192]{0}', space=vmem, size = 0x2000, scoped, tag = 'input window, operand 0']
    #allocation3 [shape = 's32[2]{0}', space=sflag, size = 0x8, scoped, tag = 'scoped memory for tpu_custom_call.1']
    #allocation4 [shape = 's32[2]{0}', space=sflag, size = 0x8, scoped, tag = 'scoped memory for tpu_custom_call.1']
    #allocation5 [shape = 'u8[8192]{0}', space=vmem, size = 0x2000, scoped, tag = 'input window, operand 1']
    #allocation6 [shape = 's32[2]{0}', space=sflag, size = 0x8, scoped, tag = 'scoped memory for tpu_custom_call.1']
    #allocation7 [shape = 'u8[8192]{0}', space=vmem, size = 0x2000, scoped, tag = 'input window, operand 2']
    #allocation8 [shape = 'u8[8192]{0}', space=vmem, size = 0x2000, scoped, tag = 'output window, operand 0']
    %8 = vsyncpa [#allocation3], 0
    %s9 = scalar_lea.sflag [#allocation3], 1
    %10 = vsyncpa %s9, 0
    %11 = vsyncpa [#allocation6], 0
    %s12 = scalar_lea.sflag [#allocation6], 1
    %13 = vsyncpa %s12, 0
    %14 = vsyncpa [#allocation4], 0
    %s15 = scalar_lea.sflag [#allocation4], 1
    %16 = vsyncpa %s15, 0
    loop: start=0, step=1, limit=4
    $region2: #{tpu_custom_call.1} parent=1 // loop_pre_header
      _
    $region3: #{tpu_custom_call.1} parent=1 // loop_header
      %s18 = sphi 0, %s22
      %p19 = scmp.ge.s32.totalorder %s18, 4
      %s25 = sphi 0, %s37
      %s26 = sphi 0, %s33
      %s27 = sphi 0, %s25
      %s28 = sphi 0, %s26
      %s29 = sphi 0, %s27
      %s30 = sphi 0, %s28
      %s40 = sphi 0, %s42
      %s43 = sphi 0, %s40
      %s44 = sphi 0, %s43
      %s60 = sphi 0, %s44
      %s66 = sphi 0, %s68
      %s69 = sphi 0, %s66
      %s70 = sphi 0, %s69
      %s86 = sphi 0, %s70
      %s94 = sphi 0, %s96
      %s97 = sphi 0, %s94
      %s98 = sphi 0, %s97
      %s114 = sphi 0, %s98
      %s122 = sphi 0, %s124
      %s125 = sphi 0, %s122
      %s126 = sphi 0, %s125
      %s142 = sphi 0, %s126
    $region4: #{tpu_custom_call.1} parent=1 // loop_header_branch
      %21 = sbr.rel (%p19) target = $region8
    $region5: #{tpu_custom_call.1} parent=1 // loop_body
      %s23 = ssub.s32 %s18, 1
      %s24 = ssub.s32 %s18, 2
      %s31 = sadd.s32 1, %s26
      %p32 = scmp.ge.s32.totalorder %s31, 1
      %s33 = scalar_select %p32, 0, %s31
      %s34 = sadd.s32 1, %s25
      %s35 = scalar_select %p32, %s34, %s25
      %p36 = scmp.ge.s32.totalorder %s35, 2
      %s37 = scalar_select %p36, 0, %s35
      %s38 = ssub.s32 %s25, %s37
      %p39 = scmp.eq.s32.totalorder %s38, 0
      %s41 = sadd.s32 %s40, 1
      %s42 = scalar_select %p39, %s40, %s41
      %p45 = pneg %p39
      %p46 = scmp.eq.s32.totalorder %s18, 1
      %p47 = por %p45, %p46
      %p48 = scmp.ne.s32.totalorder %s40, %s43
      %p49 = scmp.eq.s32.totalorder %s18, 0
      %p50 = por %p48, %p49
      %p51 = scmp.ne.s32.totalorder %s40, %s43
      %p52 = scmp.eq.s32.totalorder %s23, 1
      %p53 = por %p51, %p52
      %p54 = scmp.ne.s32.totalorder %s43, %s44
      %p55 = scmp.eq.s32.totalorder %s23, 0
      %p56 = por %p54, %p55
      %p57 = scmp.ne.s32.totalorder %s43, %s44
      %p58 = scmp.eq.s32.totalorder %s24, 1
      %p59 = por %p57, %p58
      %p61 = scmp.ne.s32.totalorder %s44, %s60
      %p62 = scmp.eq.s32.totalorder %s24, 0
      %p63 = por %p61, %p62
      %s64 = ssub.s32 %s25, %s37
      %p65 = scmp.eq.s32.totalorder %s64, 0
      %s67 = sadd.s32 %s66, 1
      %s68 = scalar_select %p65, %s66, %s67
      %p71 = pneg %p65
      %p72 = scmp.eq.s32.totalorder %s18, 1
      %p73 = por %p71, %p72
      %p74 = scmp.ne.s32.totalorder %s66, %s69
      %p75 = scmp.eq.s32.totalorder %s18, 0
      %p76 = por %p74, %p75
      %p77 = scmp.ne.s32.totalorder %s66, %s69
      %p78 = scmp.eq.s32.totalorder %s23, 1
      %p79 = por %p77, %p78
      %p80 = scmp.ne.s32.totalorder %s69, %s70
      %p81 = scmp.eq.s32.totalorder %s23, 0
      %p82 = por %p80, %p81
      %p83 = scmp.ne.s32.totalorder %s69, %s70
      %p84 = scmp.eq.s32.totalorder %s24, 1
      %p85 = por %p83, %p84
      %p87 = scmp.ne.s32.totalorder %s70, %s86
      %p88 = scmp.eq.s32.totalorder %s24, 0
      %p89 = por %p87, %p88
      %s90 = ssub.s32 %s25, %s37
      %s91 = ssub.s32 %s26, %s33
      %s92 = sor.u32 %s90, %s91
      %p93 = scmp.eq.s32.totalorder %s92, 0
      %s95 = sadd.s32 %s94, 1
      %s96 = scalar_select %p93, %s94, %s95
      %p99 = pneg %p93
      %p100 = scmp.eq.s32.totalorder %s18, 1
      %p101 = por %p99, %p100
      %p102 = scmp.ne.s32.totalorder %s94, %s97
      %p103 = scmp.eq.s32.totalorder %s18, 0
      %p104 = por %p102, %p103
      %p105 = scmp.ne.s32.totalorder %s94, %s97
      %p106 = scmp.eq.s32.totalorder %s23, 1
      %p107 = por %p105, %p106
      %p108 = scmp.ne.s32.totalorder %s97, %s98
      %p109 = scmp.eq.s32.totalorder %s23, 0
      %p110 = por %p108, %p109
      %p111 = scmp.ne.s32.totalorder %s97, %s98
      %p112 = scmp.eq.s32.totalorder %s24, 1
      %p113 = por %p111, %p112
      %p115 = scmp.ne.s32.totalorder %s98, %s114
      %p116 = scmp.eq.s32.totalorder %s24, 0
      %p117 = por %p115, %p116
      %s118 = ssub.s32 %s25, %s37
      %s119 = ssub.s32 %s26, %s33
      %s120 = sor.u32 %s118, %s119
      %p121 = scmp.eq.s32.totalorder %s120, 0
      %s123 = sadd.s32 %s122, 1
      %s124 = scalar_select %p121, %s122, %s123
      %p127 = pneg %p121
      %p128 = scmp.eq.s32.totalorder %s18, 1
      %p129 = por %p127, %p128
      %p130 = scmp.ne.s32.totalorder %s122, %s125
      %p131 = scmp.eq.s32.totalorder %s18, 0
      %p132 = por %p130, %p131
      %p133 = scmp.ne.s32.totalorder %s122, %s125
      %p134 = scmp.eq.s32.totalorder %s23, 1
      %p135 = por %p133, %p134
      %p136 = scmp.ne.s32.totalorder %s125, %s126
      %p137 = scmp.eq.s32.totalorder %s23, 0
      %p138 = por %p136, %p137
      %p139 = scmp.ne.s32.totalorder %s125, %s126
      %p140 = scmp.eq.s32.totalorder %s24, 1
      %p141 = por %p139, %p140
      %p143 = scmp.ne.s32.totalorder %s126, %s142
      %p144 = scmp.eq.s32.totalorder %s24, 0
      %p145 = por %p143, %p144
      %p146 = scmp.le.s32.totalorder 1, %s18
      %p147 = scmp.lt.s32.totalorder %s18, 3
      %p148 = pnand %p146, %p147
      %p149 = pneg %p148
      // Predicated region
      $region9: #{tpu_custom_call.1} parent=5 // pred_check
        _
      $region10: #{tpu_custom_call.1} parent=5 // pred_check_branch
        %151 = sbr.rel (%p148) target = $region12
      $region11: #{tpu_custom_call.1} parent=5 // pred_region
        %s152 = ssub.s32 %s18, 1
      $region12: #{tpu_custom_call.1} parent=5 // pred_fallthru
        _
      %p153 = scmp.lt.s32.totalorder %s18, 2
      // Predicated region
      $region13: #{tpu_custom_call.1} parent=5 // pred_check
        %p154 = pneg %p153
      $region14: #{tpu_custom_call.1} parent=5 // pred_check_branch
        %156 = sbr.rel (%p154) target = $region16
      $region15: #{tpu_custom_call.1} parent=5 // pred_region
        // Predicated region
        $region17: #{tpu_custom_call.1} parent=15 // pred_check
          %p157 = pneg %p50
        $region18: #{tpu_custom_call.1} parent=15 // pred_check_branch
          %159 = sbr.rel (%p157) target = $region20
        $region19: #{tpu_custom_call.1} parent=15 // pred_region
          %s160 = sand.u32 %s40, 1
          %s161 = scalar_lea.sflag [#allocation3], %s160
          %s162 = sand.u32 %s40, 1
          %s163 = smul.addr %s162, 8
          %s164 = scalar_lea.vmem [#allocation2], %s163
          %s166 = ssub.s32 128, 128
          %167 = vsyncadd %s161, %s166
          %s168 = smul.addr %s25, 128
          %s169 = scalar_lea.hbm %s0, %s168
          %s171 = sshll.u32 %s164, 4
          %s172 = int_to_ptr.vmem [resolvable:$true] %s171
          %174 = dma.hbm_to_vmem [thread:$0]  %s169, 128, %s172, %s161
        $region20: #{tpu_custom_call.1} parent=15 // pred_fallthru
          _
        // Predicated region
        $region21: #{tpu_custom_call.1} parent=15 // pred_check
          %p175 = pneg %p76
        $region22: #{tpu_custom_call.1} parent=15 // pred_check_branch
          %177 = sbr.rel (%p175) target = $region24
        $region23: #{tpu_custom_call.1} parent=15 // pred_region
          %s178 = sand.u32 %s18, 1
          %s179 = scalar_lea.sflag [#allocation6], %s178
          %s180 = sand.u32 %s66, 1
          %s181 = smul.addr %s180, 8
          %s182 = scalar_lea.vmem [#allocation5], %s181
          %s184 = ssub.s32 128, 128
          %185 = vsyncadd %s179, %s184
          %s186 = smul.addr %s25, 128
          %s187 = scalar_lea.hbm %s1, %s186
          %s189 = sshll.u32 %s182, 4
          %s190 = int_to_ptr.vmem [resolvable:$true] %s189
          %192 = dma.hbm_to_vmem [thread:$0]  %s187, 128, %s190, %s179
        $region24: #{tpu_custom_call.1} parent=15 // pred_fallthru
          _
        // Predicated region
        $region25: #{tpu_custom_call.1} parent=15 // pred_check
          %p193 = pneg %p104
        $region26: #{tpu_custom_call.1} parent=15 // pred_check_branch
          %195 = sbr.rel (%p193) target = $region28
        $region27: #{tpu_custom_call.1} parent=15 // pred_region
          %s196 = sand.u32 %s18, 1
          %s197 = scalar_lea.sflag [#allocation6], %s196
          %s198 = sand.u32 %s94, 1
          %s199 = smul.addr %s198, 8
          %s200 = scalar_lea.vmem [#allocation7], %s199
          %s202 = ssub.s32 128, 128
          %203 = vsyncadd %s197, %s202
          %s204 = sadd.s32 %s26, %s25
          %s205 = smul.addr %s204, 128
          %s206 = scalar_lea.hbm %s2, %s205
          %s208 = sshll.u32 %s200, 4
          %s209 = int_to_ptr.vmem [resolvable:$true] %s208
          %211 = dma.hbm_to_vmem [thread:$0]  %s206, 128, %s209, %s197
        $region28: #{tpu_custom_call.1} parent=15 // pred_fallthru
          _
      $region16: #{tpu_custom_call.1} parent=5 // pred_fallthru
        _
      %p212 = scmp.le.s32.totalorder 1, %s18
      %p213 = scmp.lt.s32.totalorder %s18, 3
      %p214 = pnand %p212, %p213
      %p215 = pneg %p214
      // Predicated region
      $region29: #{tpu_custom_call.1} parent=5 // pred_check
        _
      $region30: #{tpu_custom_call.1} parent=5 // pred_check_branch
        %217 = sbr.rel (%p214) target = $region32
      $region31: #{tpu_custom_call.1} parent=5 // pred_region
        %s218 = ssub.s32 %s18, 1
        %s219 = sand.u32 %s43, 1
        %s220 = scalar_lea.sflag [#allocation3], %s219
        %s221 = sand.u32 %s43, 1
        %s222 = smul.addr %s221, 8
        %s223 = scalar_lea.vmem [#allocation2], %s222
        // Predicated region
        $region33: #{tpu_custom_call.1} parent=31 // pred_check
          %p224 = pneg %p56
        $region34: #{tpu_custom_call.1} parent=31 // pred_check_branch
          %226 = sbr.rel (%p224) target = $region36
        $region35: #{tpu_custom_call.1} parent=31 // pred_region
          %227 = dma.done %s220, 128
        $region36: #{tpu_custom_call.1} parent=31 // pred_fallthru
          _
        %s228 = sand.u32 %s23, 1
        %s229 = scalar_lea.sflag [#allocation6], %s228
        %s230 = sand.u32 %s69, 1
        %s231 = smul.addr %s230, 8
        %s232 = scalar_lea.vmem [#allocation5], %s231
        // Predicated region
        $region37: #{tpu_custom_call.1} parent=31 // pred_check
          %p233 = pneg %p82
        $region38: #{tpu_custom_call.1} parent=31 // pred_check_branch
          %235 = sbr.rel (%p233) target = $region40
        $region39: #{tpu_custom_call.1} parent=31 // pred_region
          %236 = dma.done %s229, 128
        $region40: #{tpu_custom_call.1} parent=31 // pred_fallthru
          _
        %s237 = sand.u32 %s23, 1
        %s238 = scalar_lea.sflag [#allocation6], %s237
        %s239 = sand.u32 %s97, 1
        %s240 = smul.addr %s239, 8
        %s241 = scalar_lea.vmem [#allocation7], %s240
        // Predicated region
        $region41: #{tpu_custom_call.1} parent=31 // pred_check
          %p242 = pneg %p110
        $region42: #{tpu_custom_call.1} parent=31 // pred_check_branch
          %244 = sbr.rel (%p242) target = $region44
        $region43: #{tpu_custom_call.1} parent=31 // pred_region
          %245 = dma.done %s238, 128
        $region44: #{tpu_custom_call.1} parent=31 // pred_fallthru
          _
        %s246 = sand.u32 %s43, 1
        %s247 = scalar_lea.sflag [#allocation3], %s246
        %s248 = sand.u32 %s43, 1
        %s249 = smul.addr %s248, 8
        %s250 = scalar_lea.vmem [#allocation2], %s249
        %p251 = pneg %p56
        %p252 = pneg %p53
        %s253 = sand.u32 %s23, 1
        %s254 = scalar_lea.sflag [#allocation6], %s253
        %s255 = sand.u32 %s69, 1
        %s256 = smul.addr %s255, 8
        %s257 = scalar_lea.vmem [#allocation5], %s256
        %p258 = pneg %p82
        %p259 = pneg %p79
        %s260 = sand.u32 %s23, 1
        %s261 = scalar_lea.sflag [#allocation6], %s260
        %s262 = sand.u32 %s97, 1
        %s263 = smul.addr %s262, 8
        %s264 = scalar_lea.vmem [#allocation7], %s263
        %p265 = pneg %p110
        %p266 = pneg %p107
        %p267 = pneg %p138
        %p268 = pneg %p135
        %s269 = sand.u32 %s125, 1
        %s270 = scalar_lea.sflag [#allocation4], %s269
        %s271 = sand.u32 %s125, 1
        %s272 = smul.addr %s271, 8
        %s273 = scalar_lea.vmem [#allocation8], %s272
        %s274 = smul.u32 %s28, 8
        %s275 = scalar_lea.vmem %s223, %s274 [#allocation2]
        %v276 = vld [vmem:[%s275] sm:$0xff]
        %v277 = vld [vmem:[%s223] sm:$0xff]
        %vm278 = vcmask 261120
        %v280 = vsel %vm278, %v276, 0
        %v283 = vsel %vm278, %v277, 0
        %285 = vmatprep.subr.mxu0 0.0
        %286 = vmatpush1.xpose.msra.mxu0 %v283
        %287 = vmatprep.subr.mxu0 0.0
        %288 = vmatpush1.xpose.msra.mxu0 0.0
        %289 = vmatprep.subr.mxu0 0.0
        %290 = vmatpush1.xpose.msra.mxu0 0.0
        %291 = vmatprep.subr.mxu0 0.0
        %292 = vmatpush1.xpose.msra.mxu0 0.0
        %293 = vmatprep.subr.mxu0 0.0
        %294 = vmatpush1.xpose.msra.mxu0 0.0
        %295 = vmatprep.subr.mxu0 0.0
        %296 = vmatpush1.xpose.msra.mxu0 0.0
        %297 = vmatprep.subr.mxu0 0.0
        %298 = vmatpush1.xpose.msra.mxu0 0.0
        %299 = vmatprep.subr.mxu0 0.0
        %300 = vmatpush1.xpose.msra.mxu0 0.0
        %301 = vmatprep.subr.mxu0 0.0
        %302 = vmatpush1.xpose.msra.mxu0 0.0
        %303 = vmatprep.subr.mxu0 0.0
        %304 = vmatpush1.xpose.msra.mxu0 0.0
        %305 = vmatprep.subr.mxu0 0.0
        %306 = vmatpush1.xpose.msra.mxu0 0.0
        %307 = vmatprep.subr.mxu0 0.0
        %308 = vmatpush1.xpose.msra.mxu0 0.0
        %309 = vmatprep.subr.mxu0 0.0
        %310 = vmatpush1.xpose.msra.mxu0 0.0
        %311 = vmatprep.subr.mxu0 0.0
        %312 = vmatpush1.xpose.msra.mxu0 0.0
        %313 = vmatprep.subr.mxu0 0.0
        %314 = vmatpush1.xpose.msra.mxu0 0.0
        %315 = vmatprep.subr.mxu0 0.0
        %316 = vmatpush1.xpose.msra.mxu0 0.0
        %317 = vmatprep.subr.mxu0 0.0
        %318 = vmatpush1.xpose.msra.mxu0 0.0
        %319 = vmatprep.subr.mxu0 0.0
        %320 = vmatpush1.xpose.msra.mxu0 0.0
        %321 = vmatprep.subr.mxu0 0.0
        %322 = vmatpush1.xpose.msra.mxu0 0.0
        %323 = vmatprep.subr.mxu0 0.0
        %324 = vmatpush1.xpose.msra.mxu0 0.0
        %325 = vmatprep.subr.mxu0 0.0
        %326 = vmatpush1.xpose.msra.mxu0 0.0
        %327 = vmatprep.subr.mxu0 0.0
        %328 = vmatpush1.xpose.msra.mxu0 0.0
        %329 = vmatprep.subr.mxu0 0.0
        %330 = vmatpush1.xpose.msra.mxu0 0.0
        %331 = vmatprep.subr.mxu0 0.0
        %332 = vmatpush1.xpose.msra.mxu0 0.0
        %333 = vmatprep.subr.mxu0 0.0
        %334 = vmatpush1.xpose.msra.mxu0 0.0
        %335 = vmatprep.subr.mxu0 0.0
        %336 = vmatpush1.xpose.msra.mxu0 0.0
        %337 = vmatprep.subr.mxu0 0.0
        %338 = vmatpush1.xpose.msra.mxu0 0.0
        %339 = vmatprep.subr.mxu0 0.0
        %340 = vmatpush1.xpose.msra.mxu0 0.0
        %341 = vmatprep.subr.mxu0 0.0
        %342 = vmatpush1.xpose.msra.mxu0 0.0
        %343 = vmatprep.subr.mxu0 0.0
        %344 = vmatpush1.xpose.msra.mxu0 0.0
        %345 = vmatprep.subr.mxu0 0.0
        %346 = vmatpush1.xpose.msra.mxu0 0.0
        %347 = vmatprep.subr.mxu0 0.0
        %348 = vmatpush1.xpose.msra.mxu0 0.0
        %349 = vmatprep.mubr.f32.mxu0 0.0
        %350 = vmatmul.mubr.f32.gmra.mrb[0].mxu0 %v280
        %v351 = vpop.f32.mrb[0].mxu0
        %v352 = vadd.f32 0.0, %v351
        %v353 = vpop.f32.mrb[0].mxu0
        %354 = vdwg.mxu0
        %v355 = vmul.f32 %v352, 0.03125
        %v356 = vld [vmem:[%s241] sm:$0xff]
        %v357 = vmax.f32 %v356, 0.0
        %v358 = vmin.f32 %v357, 1.0
        %v359 = vmul.f32 %v355, 1.442695
        %v360 = vpow.pop %v359
        %v361 = vmul.f32 %v360, %v358
        %vm362 = vcmask 64512
        %v363 = vsel %vm362, %v361, 0.0
        %364 = vadd.xlane.f32.xlu0 %v363
        %v365 = vpop.xlane.xlu0 %364
        %v366 = vadd.f32 %v365, 1e-10
        %v367 = vrcp.pop %v366
        %v368 = vmul.f32 %v361, %v367
        %v369 = vld [vmem:[%s232] sm:$0xff]
        %v371 = vsel %vm362, %v368, 0
        %373 = vmatprep.subr.mxu0 0.0
        %374 = vmatpush1.msra.mxu0 %v369
        %375 = vmatprep.subr.mxu0 0.0
        %376 = vmatpush1.msra.mxu0 0.0
        %377 = vmatprep.subr.mxu0 0.0
        %378 = vmatpush1.msra.mxu0 0.0
        %379 = vmatprep.subr.mxu0 0.0
        %380 = vmatpush1.msra.mxu0 0.0
        %381 = vmatprep.subr.mxu0 0.0
        %382 = vmatpush1.msra.mxu0 0.0
        %383 = vmatprep.subr.mxu0 0.0
        %384 = vmatpush1.msra.mxu0 0.0
        %385 = vmatprep.subr.mxu0 0.0
        %386 = vmatpush1.msra.mxu0 0.0
        %387 = vmatprep.subr.mxu0 0.0
        %388 = vmatpush1.msra.mxu0 0.0
        %389 = vmatprep.subr.mxu0 0.0
        %390 = vmatpush1.msra.mxu0 0.0
        %391 = vmatprep.subr.mxu0 0.0
        %392 = vmatpush1.msra.mxu0 0.0
        %393 = vmatprep.subr.mxu0 0.0
        %394 = vmatpush1.msra.mxu0 0.0
        %395 = vmatprep.subr.mxu0 0.0
        %396 = vmatpush1.msra.mxu0 0.0
        %397 = vmatprep.subr.mxu0 0.0
        %398 = vmatpush1.msra.mxu0 0.0
        %399 = vmatprep.subr.mxu0 0.0
        %400 = vmatpush1.msra.mxu0 0.0
        %401 = vmatprep.subr.mxu0 0.0
        %402 = vmatpush1.msra.mxu0 0.0
        %403 = vmatprep.subr.mxu0 0.0
        %404 = vmatpush1.msra.mxu0 0.0
        %405 = vmatprep.subr.mxu0 0.0
        %406 = vmatpush1.msra.mxu0 0.0
        %407 = vmatprep.subr.mxu0 0.0
        %408 = vmatpush1.msra.mxu0 0.0
        %409 = vmatprep.subr.mxu0 0.0
        %410 = vmatpush1.msra.mxu0 0.0
        %411 = vmatprep.subr.mxu0 0.0
        %412 = vmatpush1.msra.mxu0 0.0
        %413 = vmatprep.subr.mxu0 0.0
        %414 = vmatpush1.msra.mxu0 0.0
        %415 = vmatprep.subr.mxu0 0.0
        %416 = vmatpush1.msra.mxu0 0.0
        %417 = vmatprep.subr.mxu0 0.0
        %418 = vmatpush1.msra.mxu0 0.0
        %419 = vmatprep.subr.mxu0 0.0
        %420 = vmatpush1.msra.mxu0 0.0
        %421 = vmatprep.subr.mxu0 0.0
        %422 = vmatpush1.msra.mxu0 0.0
        %423 = vmatprep.subr.mxu0 0.0
        %424 = vmatpush1.msra.mxu0 0.0
        %425 = vmatprep.subr.mxu0 0.0
        %426 = vmatpush1.msra.mxu0 0.0
        %427 = vmatprep.subr.mxu0 0.0
        %428 = vmatpush1.msra.mxu0 0.0
        %429 = vmatprep.subr.mxu0 0.0
        %430 = vmatpush1.msra.mxu0 0.0
        %431 = vmatprep.subr.mxu0 0.0
        %432 = vmatpush1.msra.mxu0 0.0
        %433 = vmatprep.subr.mxu0 0.0
        %434 = vmatpush1.msra.mxu0 0.0
        %435 = vmatprep.subr.mxu0 0.0
        %436 = vmatpush1.msra.mxu0 0.0
        %437 = vmatprep.mubr.f32.mxu0 0.0
        %438 = vmatmul.mubr.f32.gmra.mrb[0].mxu0 %v371
        %v439 = vpop.f32.mrb[0].mxu0
        %v440 = vadd.f32 0.0, %v439
        %v441 = vpop.f32.mrb[0].mxu0
        %442 = vdwg.mxu0
        %443 = vst.msk [vmem:[%s273] sm:$0xff] %vm278, %v440
        %s444 = sand.u32 %s125, 1
        %s445 = scalar_lea.sflag [#allocation4], %s444
        %s446 = sand.u32 %s125, 1
        %s447 = smul.addr %s446, 8
        %s448 = scalar_lea.vmem [#allocation8], %s447
        // Predicated region
        $region45: #{tpu_custom_call.1} parent=31 // pred_check
          %p449 = pneg %p135
        $region46: #{tpu_custom_call.1} parent=31 // pred_check_branch
          %451 = sbr.rel (%p449) target = $region48
        $region47: #{tpu_custom_call.1} parent=31 // pred_region
          %s453 = ssub.s32 128, 128
          %454 = vsyncadd %s445, %s453
          %s455 = sadd.s32 %s28, %s27
          %s456 = smul.addr %s455, 128
          %s457 = scalar_lea.hbm %s3, %s456
          %s459 = sshll.u32 %s448, 4
          %s460 = int_to_ptr.vmem [resolvable:$true] %s459
          %462 = dma.vmem_to_hbm [thread:$0]  %s460, 128, %s457, %s445
        $region48: #{tpu_custom_call.1} parent=31 // pred_fallthru
          _
      $region32: #{tpu_custom_call.1} parent=5 // pred_fallthru
        _
      %p463 = scmp.le.s32.totalorder 2, %s18
      // Predicated region
      $region49: #{tpu_custom_call.1} parent=5 // pred_check
        %p464 = pneg %p463
      $region50: #{tpu_custom_call.1} parent=5 // pred_check_branch
        %466 = sbr.rel (%p464) target = $region52
      $region51: #{tpu_custom_call.1} parent=5 // pred_region
        %s467 = ssub.s32 %s18, 2
        // Predicated region
        $region53: #{tpu_custom_call.1} parent=51 // pred_check
          %p468 = pneg %p141
        $region54: #{tpu_custom_call.1} parent=51 // pred_check_branch
          %470 = sbr.rel (%p468) target = $region56
        $region55: #{tpu_custom_call.1} parent=51 // pred_region
          %s471 = sand.u32 %s126, 1
          %s472 = scalar_lea.sflag [#allocation4], %s471
          %s473 = sand.u32 %s126, 1
          %s474 = smul.addr %s473, 8
          %s475 = scalar_lea.vmem [#allocation8], %s474
          %476 = dma.done %s472, 128
        $region56: #{tpu_custom_call.1} parent=51 // pred_fallthru
          _
      $region52: #{tpu_custom_call.1} parent=5 // pred_fallthru
        _
    $region6: #{tpu_custom_call.1} parent=1 // loop_footer
      %s22 = sadd.s32 1, %s18
    $region7: #{tpu_custom_call.1} parent=1 // loop_footer_branch
      %17 = sbr.rel target = $region3
    $region8: #{tpu_custom_call.1} parent=1 // loop_exit
      _
    %477 = vsyncpa [#allocation3], 1
    %s478 = scalar_lea.sflag [#allocation3], 1
    %479 = vsyncpa %s478, 1
    %480 = vsyncpa [#allocation6], 1
    %s481 = scalar_lea.sflag [#allocation6], 1
    %482 = vsyncpa %s481, 1
    %483 = vsyncpa [#allocation4], 1
    %s484 = scalar_lea.sflag [#allocation4], 1
    %485 = vsyncpa %s484, 1

</llo_original>
